<compile_context>
chip_gen: v6e
topology: v6e:2x2x1
jax: 0.10.0
libtpu: 0.0.40
codegen_flags: <defaults>
</compile_context>

<pallas_src>
import functools
import math

import jax
import jax.numpy as jnp
from jax.experimental import pallas as pl
from jax.experimental.pallas import tpu as pltpu


def _round_up(x, m):
    return ((x + m - 1) // m) * m


def _softmax_kernel(x_ref, o_ref, *, groups):
    """Row softmax on a (tile, lanes) VMEM block.

    groups > 1 means each lane row packs `groups` independent logical rows of
    length lanes // groups; the softmax is segmented accordingly (the reshape
    is an in-VMEM relayout, hidden under the HBM-bound DMA pipeline).
    """
    x = x_ref[...].astype(jnp.float32)
    tile, lanes = x.shape
    if groups > 1:
        x = x.reshape(tile, groups, lanes // groups)
    m = jnp.max(x, axis=-1, keepdims=True)
    e = jnp.exp(x - m)
    s = jnp.sum(e, axis=-1, keepdims=True)
    out = e * (1.0 / s)  # exact reciprocal on the tiny (tile[,g],1) sums
    if groups > 1:
        out = out.reshape(tile, lanes)
    o_ref[...] = out.astype(o_ref.dtype)


def _vmem_budgets():
    """(per-step block budget, scoped vmem limit), generation-aware."""
    cap = None
    try:
        cap = getattr(pltpu.get_tpu_info(), "vmem_capacity_bytes", None)
    except Exception:
        cap = None
    if cap is None:
        cap = 64 * 1024 * 1024                       # conservative: v7x per-TC
    if cap >= 128 * 1024 * 1024:                     # v5e / v6e (128 MiB)
        return 24 * 1024 * 1024, 64 * 1024 * 1024
    return 10 * 1024 * 1024, 32 * 1024 * 1024        # v7x (64 MiB per TC)


def _pick_tile_rows(n_rows, lane_n, in_dsize, out_dsize, block_budget,
                    max_rows=8192):
    """Largest multiple-of-8 row tile whose double-buffered in/out blocks plus
    f32 compute temporaries fit in block_budget, with >= 2 grid blocks."""
    temp_bytes = 2 * 4  # f32 cast copy + exp() live in VMEM, not double-buffered
    per_row = lane_n * (2 * (in_dsize + out_dsize) + temp_bytes)
    t = block_budget // per_row
    t = max(8, min(int(t), max_rows))
    t = (t // 8) * 8
    t = min(t, _round_up(n_rows, 8))
    # v7x has 2 TensorCores: make sure the 'parallel' axis has >= 2 blocks.
    if n_rows > 8 and pl.cdiv(n_rows, t) < 2:
        t = _round_up(pl.cdiv(n_rows, 2), 8)
    return max(t, 8)


@jax.jit
def _softmax_rows(x2):
    """x2: (R, N) -> row-wise softmax over the last axis (floating dtype)."""
    R, N = x2.shape

    # torch.softmax rejects integer dtypes; we promote to f32 instead
    # (documented behavioral difference, not a numeric bug).
    if not jnp.issubdtype(x2.dtype, jnp.floating):
        x2 = x2.astype(jnp.float32)
    dtype = x2.dtype
    dsize = jnp.dtype(dtype).itemsize

    # Pack logical rows into the 128-lane axis when N is not lane-dense and a
    # free row-major reshape exists: (R, N) -> (R//k, k*N), k*N % 128 == 0.
    groups = 1
    if N % 128 != 0:
        k = math.lcm(N, 128) // N
        if k * N <= 4096 and R % k == 0:
            groups = k
    r_rows = R // groups
    lane_n = N * groups
    xk = x2.reshape(r_rows, lane_n) if groups > 1 else x2

    block_budget, vmem_limit = _vmem_budgets()
    tile_rows = _pick_tile_rows(r_rows, lane_n, dsize, dsize, block_budget)
    n_blocks = pl.cdiv(r_rows, tile_rows)  # partial last block handled by Pallas

    # Deeper buffering only pays off for small blocks over many grid steps.
    in_block_bytes = tile_rows * lane_n * dsize
    if n_blocks >= 4 and in_block_bytes < (1 << 20):
        in_spec = pl.BlockSpec((tile_rows, lane_n), lambda i: (i, 0),
                               pipeline_mode=pl.Buffered(3))
    else:
        in_spec = pl.BlockSpec((tile_rows, lane_n), lambda i: (i, 0))

    out = pl.pallas_call(
        functools.partial(_softmax_kernel, groups=groups),
        out_shape=jax.ShapeDtypeStruct((r_rows, lane_n), dtype),
        grid_spec=pltpu.PrefetchScalarGridSpec(
            num_scalar_prefetch=0,
            grid=(n_blocks,),
            in_specs=[in_spec],
            out_specs=pl.BlockSpec((tile_rows, lane_n), lambda i: (i, 0)),
        ),
        compiler_params=pltpu.CompilerParams(
            dimension_semantics=("parallel",),
            vmem_limit_bytes=vmem_limit,
        ),
        cost_estimate=pl.CostEstimate(
            flops=int(4 * R * N),
            transcendentals=int(R * N),
            bytes_accessed=int(2 * R * N * dsize),
        ),
    )(xk)

    return out.reshape(R, N) if groups > 1 else out


def gc_softmax(edge_index, edge_weight=None, frmt='adj'):
    """JAX/Pallas equivalent of gcSoftmax.forward."""
    if frmt == 'adj':
        if edge_index.shape[-2] != edge_index.shape[-1]:
            raise ValueError(
                'Format given as "%s" but final 2 dimensions do not match '
                'with shape=%s' % (frmt, edge_index.shape))
        N = edge_index.shape[-1]
        lead = edge_index.shape[:-2]
        R = int(math.prod(lead)) * N
        out2 = _softmax_rows(edge_index.reshape(R, N))
        out = out2.reshape(edge_index.shape)
        return (out, edge_weight)
    elif frmt == 'coo':
        # TODO(synk): 'coo' path depends on pyg_util.normalize_edge_weight
        # (scatter-based edge-weight normalization) not defined in the module.
        raise NotImplementedError('coo format not supported in this kernel')
    else:
        raise ValueError('Unknown format "%s"' % frmt)


if __name__ == "__main__":
    key = jax.random.PRNGKey(0)
    key_a, key_b = jax.random.split(key)

    # Adjacency-style input: (batch=2, channels=4, N=16, N=16), square last dims.
    # N=16 exercises the row-packing (groups=8, lane-dense 128-wide blocks).
    x = jax.random.normal(key_a, (2, 4, 16, 16), dtype=jnp.float32)
    out, ew = gc_softmax(x, None, frmt='adj')
    out = jax.block_until_ready(out)

    ref = jax.nn.softmax(x, axis=-1)
    assert ew is None
    assert out.shape == x.shape
    assert out.dtype == x.dtype
    assert jnp.allclose(out, ref, atol=1e-5, rtol=1e-5)
    assert jnp.allclose(jnp.sum(out, axis=-1), 1.0, atol=1e-5)

    # Lane-dense case (N multiple of 128 -> no packing, no masking).
    x_big = jax.random.normal(key_b, (2, 256, 256), dtype=jnp.float32)
    out_big, _ = gc_softmax(x_big, None, frmt='adj')
    out_big = jax.block_until_ready(out_big)
    ref_big = jax.nn.softmax(x_big, axis=-1)
    assert jnp.allclose(out_big, ref_big, atol=1e-5, rtol=1e-5)

    print("KERNEL_OK")
</pallas_src>

<mosaic_0001>
module attributes {stable_mosaic.version = 11 : i64} {
  func.func @_softmax_kernel(%arg0: i32, %arg1: memref<8x128xf32, #tpu.memory_space<vmem>>, %arg2: memref<8x128xf32, #tpu.memory_space<vmem>>) attributes {dimension_semantics = [#tpu.dimension_semantics<parallel>], iteration_bounds = array<i64: 2>, scalar_prefetch = 0 : i64, scratch_operands = 0 : i64, tpu.core_type = #tpu.core_type<tc>, window_params = [{transform_indices = @transform_0, window_bounds = array<i64: 8, 128>}, {transform_indices = @transform_1, window_bounds = array<i64: 8, 128>}]} {
    %c0 = arith.constant 0 : index
    %c0_0 = arith.constant 0 : index
    %0 = vector.load %arg1[%c0, %c0_0] : memref<8x128xf32, #tpu.memory_space<vmem>>, vector<8x128xf32>
    %1 = vector.shape_cast %0 : vector<8x128xf32> to vector<8x8x16xf32>
    %cst = arith.constant dense<0xFF800000> : vector<8x8xf32>
    %2 = vector.multi_reduction <maximumf>, %1, %cst [2] : vector<8x8x16xf32> to vector<8x8xf32>
    %3 = vector.shape_cast %2 : vector<8x8xf32> to vector<8x8x1xf32>
    %4 = vector.broadcast %3 : vector<8x8x1xf32> to vector<8x8x16xf32>
    %5 = arith.subf %1, %4 : vector<8x8x16xf32>
    %6 = math.exp %5 : vector<8x8x16xf32>
    %cst_1 = arith.constant dense<0.000000e+00> : vector<8x8xf32>
    %7 = vector.multi_reduction <add>, %6, %cst_1 [2] : vector<8x8x16xf32> to vector<8x8xf32>
    %8 = vector.shape_cast %7 : vector<8x8xf32> to vector<8x8x1xf32>
    %cst_2 = arith.constant 1.000000e+00 : f32
    %9 = vector.broadcast %cst_2 : f32 to vector<8x8x1xf32>
    %10 = arith.divf %9, %8 : vector<8x8x1xf32>
    %11 = vector.broadcast %10 : vector<8x8x1xf32> to vector<8x8x16xf32>
    %12 = arith.mulf %6, %11 : vector<8x8x16xf32>
    %13 = vector.shape_cast %12 : vector<8x8x16xf32> to vector<8x128xf32>
    %c0_3 = arith.constant 0 : index
    %c0_4 = arith.constant 0 : index
    %14 = vector.load %arg2[%c0_3, %c0_4] : memref<8x128xf32, #tpu.memory_space<vmem>>, vector<8x128xf32>
    tpu.vector_store %arg2[%c0_3, %c0_4], %13 {strides = array<i32>} : memref<8x128xf32, #tpu.memory_space<vmem>>, vector<8x128xf32>,
    return
  }
  func.func @transform_0(%arg0: i32) -> (i32, i32) {
    %c0_i32 = arith.constant 0 : i32
    %c0_i32_0 = arith.constant 0 : i32
    return %arg0, %c0_i32 : i32, i32
  }
  func.func @transform_1(%arg0: i32) -> (i32, i32) {
    %c0_i32 = arith.constant 0 : i32
    %c0_i32_0 = arith.constant 0 : i32
    return %arg0, %c0_i32 : i32, i32
  }
}

</mosaic_0001>

<llo_original>
// kernel: _softmax_rows.1
$region0: #{_softmax_rows.1}
  #allocation0 [shape = 'u32[]', space=smem, size = 0x4, offset = 0x4, fixed_abs, tag = 'smem constant byte address 0x4 - core index']
  #allocation1 [shape = 'u32[144,128]{1,0:T(1,128)}', space=vmem, size = 0x12000, scoped, tag = 'internal scratch']
  %s0 = inlined_call_operand.vmem [shape: f32[16,128], index: 0, kind: input, shape index: {}]
  %s1 = inlined_call_operand.vmem [shape: f32[16,128], index: 1, kind: output, shape index: {}]
  %s2 = sld [smem:[#allocation0]]
  $region37: #{_softmax_rows.1} parent=0
    _
  %s4 = ssub.s32 1, %s2
  %s5 = scalar_select 0, %s4, %s2
  loop: start=0, step=1, limit=4
  $region2: #{_softmax_rows.1} parent=0 // loop_pre_header
    _
  $region3: #{_softmax_rows.1} parent=0 // loop_header
    %s7 = sphi 0, %s11
    %p8 = scmp.ge.s32.totalorder %s7, 4
    %s17 = sphi 0, %s19
    %s20 = sphi 0, %s17
    %s21 = sphi 0, %s20
    %s37 = sphi 0, %s21
    %s43 = sphi 0, %s45
    %s46 = sphi 0, %s43
    %s47 = sphi 0, %s46
    %s63 = sphi 0, %s47
  $region4: #{_softmax_rows.1} parent=0 // loop_header_branch
    %10 = sbr.rel (%p8) target = $region8
  $region5: #{_softmax_rows.1} parent=0 // loop_body
    %s12 = ssub.s32 %s7, 1
    %s13 = ssub.s32 %s7, 2
    %s14 = sadd.s32 %s7, 1
    %s15 = ssub.s32 %s7, %s14
    %p16 = scmp.eq.s32.totalorder %s15, 0
    %s18 = sadd.s32 %s17, 1
    %s19 = scalar_select %p16, %s17, %s18
    %p22 = pneg %p16
    %p23 = scmp.eq.s32.totalorder %s7, 1
    %p24 = por %p22, %p23
    %p25 = scmp.ne.s32.totalorder %s17, %s20
    %p26 = scmp.eq.s32.totalorder %s7, 0
    %p27 = por %p25, %p26
    %p28 = scmp.ne.s32.totalorder %s17, %s20
    %p29 = scmp.eq.s32.totalorder %s12, 1
    %p30 = por %p28, %p29
    %p31 = scmp.ne.s32.totalorder %s20, %s21
    %p32 = scmp.eq.s32.totalorder %s12, 0
    %p33 = por %p31, %p32
    %p34 = scmp.ne.s32.totalorder %s20, %s21
    %p35 = scmp.eq.s32.totalorder %s13, 1
    %p36 = por %p34, %p35
    %p38 = scmp.ne.s32.totalorder %s21, %s37
    %p39 = scmp.eq.s32.totalorder %s13, 0
    %p40 = por %p38, %p39
    %s41 = ssub.s32 %s7, %s14
    %p42 = scmp.eq.s32.totalorder %s41, 0
    %s44 = sadd.s32 %s43, 1
    %s45 = scalar_select %p42, %s43, %s44
    %p48 = pneg %p42
    %p49 = scmp.eq.s32.totalorder %s7, 1
    %p50 = por %p48, %p49
    %p51 = scmp.ne.s32.totalorder %s43, %s46
    %p52 = scmp.eq.s32.totalorder %s7, 0
    %p53 = por %p51, %p52
    %p54 = scmp.ne.s32.totalorder %s43, %s46
    %p55 = scmp.eq.s32.totalorder %s12, 1
    %p56 = por %p54, %p55
    %p57 = scmp.ne.s32.totalorder %s46, %s47
    %p58 = scmp.eq.s32.totalorder %s12, 0
    %p59 = por %p57, %p58
    %p60 = scmp.ne.s32.totalorder %s46, %s47
    %p61 = scmp.eq.s32.totalorder %s13, 1
    %p62 = por %p60, %p61
    %p64 = scmp.ne.s32.totalorder %s47, %s63
    %p65 = scmp.eq.s32.totalorder %s13, 0
    %p66 = por %p64, %p65
    %p67 = scmp.le.s32.totalorder 1, %s7
    %p68 = scmp.lt.s32.totalorder %s7, 3
    %p69 = pnand %p67, %p68
    %p70 = pneg %p69
    // Predicated region
    $region9: #{_softmax_rows.1} parent=5 // pred_check
      _
    $region10: #{_softmax_rows.1} parent=5 // pred_check_branch
      %72 = sbr.rel (%p69) target = $region12
    $region11: #{_softmax_rows.1} parent=5 // pred_region
      %s73 = ssub.s32 %s7, 1
    $region12: #{_softmax_rows.1} parent=5 // pred_fallthru
      _
    %p74 = scmp.lt.s32.totalorder %s7, 2
    // Predicated region
    $region13: #{_softmax_rows.1} parent=5 // pred_check
      %p75 = pneg %p74
    $region14: #{_softmax_rows.1} parent=5 // pred_check_branch
      %77 = sbr.rel (%p75) target = $region16
    $region15: #{_softmax_rows.1} parent=5 // pred_region
      // Predicated region
      $region17: #{_softmax_rows.1} parent=15 // pred_check
        %p78 = pneg %p27
      $region18: #{_softmax_rows.1} parent=15 // pred_check_branch
        %80 = sbr.rel (%p78) target = $region20
      $region19: #{_softmax_rows.1} parent=15 // pred_region
        %p81 = scmp.lt.s32.totalorder %s7, 1
        %s82 = scalar_select %p81, %s7, 1
        %s83 = smul.addr %s82, 8
        %s84 = scalar_lea.vmem %s0, %s83
      $region20: #{_softmax_rows.1} parent=15 // pred_fallthru
        _
    $region16: #{_softmax_rows.1} parent=5 // pred_fallthru
      _
    %p85 = scmp.le.s32.totalorder 1, %s7
    %p86 = scmp.lt.s32.totalorder %s7, 3
    %p87 = pnand %p85, %p86
    %p88 = pneg %p87
    // Predicated region
    $region21: #{_softmax_rows.1} parent=5 // pred_check
      _
    $region22: #{_softmax_rows.1} parent=5 // pred_check_branch
      %90 = sbr.rel (%p87) target = $region24
    $region23: #{_softmax_rows.1} parent=5 // pred_region
      %s91 = ssub.s32 %s7, 1
      %p92 = scmp.lt.s32.totalorder %s12, 1
      %s93 = scalar_select %p92, %s12, 1
      %s94 = smul.addr %s93, 8
      %s95 = scalar_lea.vmem %s0, %s94
      %p96 = pneg %p33
      %p97 = pneg %p30
      %p98 = pneg %p59
      %p99 = pneg %p56
      %p100 = scmp.lt.s32.totalorder %s12, 1
      %s101 = scalar_select %p100, %s12, 1
      %s102 = smul.addr %s101, 8
      %s103 = scalar_lea.vmem %s1, %s102
      %p104 = scmp.lt.s32.totalorder %s12, 1
      %s105 = scalar_select %p104, %s12, 1
      %s106 = smul.addr %s105, 8
      %s107 = scalar_lea.vmem %s0, %s106
      %p108 = scmp.lt.s32.totalorder %s12, 1
      %s109 = scalar_select %p108, %s12, 1
      %s110 = smul.addr %s109, 8
      %s111 = scalar_lea.vmem %s1, %s110
      %v112 = vld [vmem:[%s107] sm:$0xff]
      %114 = vrot.lane.b32.xlu0 %v112, 112
      %v115 = vpop.permute.xlu0 %114
      %117 = vrot.lane.b32.xlu0 %v112, 96
      %v118 = vpop.permute.xlu0 %117
      %120 = vrot.lane.b32.xlu0 %v112, 80
      %v121 = vpop.permute.xlu0 %120
      %123 = vrot.lane.b32.xlu0 %v112, 64
      %v124 = vpop.permute.xlu0 %123
      %126 = vrot.lane.b32.xlu0 %v112, 48
      %v127 = vpop.permute.xlu0 %126
      %129 = vrot.lane.b32.xlu0 %v112, 32
      %v130 = vpop.permute.xlu0 %129
      %132 = vrot.lane.b32.xlu0 %v112, 16
      %v133 = vpop.permute.xlu0 %132
      %v135 = vcombine.low %v112, %v118
      %v136 = vcombine.high %v112, %v118
      %v138 = vunpack.c.l.s4 1983009808
      %v139 = vunpack.c.0.s8 %v138
      %v140 = vlaneseq
      %v141 = vshrl.u32 %v140, 7
      %v142 = vsub.s32 %v139, %v141
      %v143 = vrot.slane %v135, %v142
      %v145 = vunpack.c.l.s4 1983009808
      %v146 = vunpack.c.0.s8 %v145
      %v147 = vlaneseq
      %v148 = vshrl.u32 %v147, 7
      %v149 = vsub.s32 %v146, %v148
      %v150 = vrot.slane %v136, %v149
      %v151 = vcombine.low %v115, %v121
      %v152 = vcombine.high %v115, %v121
      %v154 = vunpack.c.l.s4 1983009808
      %v155 = vunpack.c.0.s8 %v154
      %v156 = vlaneseq
      %v157 = vshrl.u32 %v156, 7
      %v158 = vsub.s32 %v155, %v157
      %v159 = vrot.slane %v151, %v158
      %v161 = vunpack.c.l.s4 1983009808
      %v162 = vunpack.c.0.s8 %v161
      %v163 = vlaneseq
      %v164 = vshrl.u32 %v163, 7
      %v165 = vsub.s32 %v162, %v164
      %v166 = vrot.slane %v152, %v165
      %v167 = vcombine.low %v124, %v130
      %v168 = vcombine.high %v124, %v130
      %v170 = vunpack.c.l.s4 1983009808
      %v171 = vunpack.c.0.s8 %v170
      %v172 = vlaneseq
      %v173 = vshrl.u32 %v172, 7
      %v174 = vsub.s32 %v171, %v173
      %v175 = vrot.slane %v167, %v174
      %v177 = vunpack.c.l.s4 1983009808
      %v178 = vunpack.c.0.s8 %v177
      %v179 = vlaneseq
      %v180 = vshrl.u32 %v179, 7
      %v181 = vsub.s32 %v178, %v180
      %v182 = vrot.slane %v168, %v181
      %v183 = vcombine.low %v127, %v133
      %v184 = vcombine.high %v127, %v133
      %v186 = vunpack.c.l.s4 1983009808
      %v187 = vunpack.c.0.s8 %v186
      %v188 = vlaneseq
      %v189 = vshrl.u32 %v188, 7
      %v190 = vsub.s32 %v187, %v189
      %v191 = vrot.slane %v183, %v190
      %v193 = vunpack.c.l.s4 1983009808
      %v194 = vunpack.c.0.s8 %v193
      %v195 = vlaneseq
      %v196 = vshrl.u32 %v195, 7
      %v197 = vsub.s32 %v194, %v196
      %v198 = vrot.slane %v184, %v197
      %v199 = vcombine.low %v143, %v159
      %v200 = vcombine.high %v143, %v159
      %v202 = vunpack.c.l.s4 1934713408
      %v203 = vunpack.c.0.s8 %v202
      %v204 = vlaneseq
      %v205 = vshrl.u32 %v204, 7
      %v206 = vsub.s32 %v203, %v205
      %v207 = vrot.slane %v199, %v206
      %v209 = vunpack.c.l.s4 1934713408
      %v210 = vunpack.c.0.s8 %v209
      %v211 = vlaneseq
      %v212 = vshrl.u32 %v211, 7
      %v213 = vsub.s32 %v210, %v212
      %v214 = vrot.slane %v200, %v213
      %v215 = vcombine.low %v150, %v166
      %v216 = vcombine.high %v150, %v166
      %v218 = vunpack.c.l.s4 1934713408
      %v219 = vunpack.c.0.s8 %v218
      %v220 = vlaneseq
      %v221 = vshrl.u32 %v220, 7
      %v222 = vsub.s32 %v219, %v221
      %v223 = vrot.slane %v215, %v222
      %v225 = vunpack.c.l.s4 1934713408
      %v226 = vunpack.c.0.s8 %v225
      %v227 = vlaneseq
      %v228 = vshrl.u32 %v227, 7
      %v229 = vsub.s32 %v226, %v228
      %v230 = vrot.slane %v216, %v229
      %v231 = vcombine.low %v175, %v191
      %v232 = vcombine.high %v175, %v191
      %v234 = vunpack.c.l.s4 1934713408
      %v235 = vunpack.c.0.s8 %v234
      %v236 = vlaneseq
      %v237 = vshrl.u32 %v236, 7
      %v238 = vsub.s32 %v235, %v237
      %v239 = vrot.slane %v231, %v238
      %v241 = vunpack.c.l.s4 1934713408
      %v242 = vunpack.c.0.s8 %v241
      %v243 = vlaneseq
      %v244 = vshrl.u32 %v243, 7
      %v245 = vsub.s32 %v242, %v244
      %v246 = vrot.slane %v232, %v245
      %v247 = vcombine.low %v182, %v198
      %v248 = vcombine.high %v182, %v198
      %v250 = vunpack.c.l.s4 1934713408
      %v251 = vunpack.c.0.s8 %v250
      %v252 = vlaneseq
      %v253 = vshrl.u32 %v252, 7
      %v254 = vsub.s32 %v251, %v253
      %v255 = vrot.slane %v247, %v254
      %v257 = vunpack.c.l.s4 1934713408
      %v258 = vunpack.c.0.s8 %v257
      %v259 = vlaneseq
      %v260 = vshrl.u32 %v259, 7
      %v261 = vsub.s32 %v258, %v260
      %v262 = vrot.slane %v248, %v261
      %v263 = vcombine.low %v207, %v239
      %v264 = vcombine.high %v207, %v239
      %v265 = vcombine.low %v214, %v246
      %v266 = vcombine.high %v214, %v246
      %v267 = vcombine.low %v223, %v255
      %v268 = vcombine.high %v223, %v255
      %v269 = vcombine.low %v230, %v262
      %v270 = vcombine.high %v230, %v262
      %vm271 = vcmask 130048
      %v272 = vsel %vm271, %v263, -inf
      %273 = vmax.xlane.f32.xlu0 %v272
      %v274 = vpop.xlane.xlu0 %273
      %v275 = vsel %vm271, %v264, -inf
      %276 = vmax.xlane.f32.xlu0 %v275
      %v277 = vpop.xlane.xlu0 %276
      %v278 = vsel %vm271, %v265, -inf
      %279 = vmax.xlane.f32.xlu0 %v278
      %v280 = vpop.xlane.xlu0 %279
      %v281 = vsel %vm271, %v266, -inf
      %282 = vmax.xlane.f32.xlu0 %v281
      %v283 = vpop.xlane.xlu0 %282
      %v284 = vsel %vm271, %v267, -inf
      %285 = vmax.xlane.f32.xlu0 %v284
      %v286 = vpop.xlane.xlu0 %285
      %v287 = vsel %vm271, %v268, -inf
      %288 = vmax.xlane.f32.xlu0 %v287
      %v289 = vpop.xlane.xlu0 %288
      %v290 = vsel %vm271, %v269, -inf
      %291 = vmax.xlane.f32.xlu0 %v290
      %v292 = vpop.xlane.xlu0 %291
      %v293 = vsel %vm271, %v270, -inf
      %294 = vmax.xlane.f32.xlu0 %v293
      %v295 = vpop.xlane.xlu0 %294
      %v296 = vsub.f32 %v263, %v274
      %v297 = vsub.f32 %v264, %v277
      %v298 = vsub.f32 %v265, %v280
      %v299 = vsub.f32 %v266, %v283
      %v300 = vsub.f32 %v267, %v286
      %v301 = vsub.f32 %v268, %v289
      %v302 = vsub.f32 %v269, %v292
      %v303 = vsub.f32 %v270, %v295
      %v304 = vmul.f32 %v296, 1.442695
      %v305 = vpow.pop %v304
      %v306 = vmul.f32 %v297, 1.442695
      %v307 = vpow.pop %v306
      %v308 = vmul.f32 %v298, 1.442695
      %v309 = vpow.pop %v308
      %v310 = vmul.f32 %v299, 1.442695
      %v311 = vpow.pop %v310
      %v312 = vmul.f32 %v300, 1.442695
      %v313 = vpow.pop %v312
      %v314 = vmul.f32 %v301, 1.442695
      %v315 = vpow.pop %v314
      %v316 = vmul.f32 %v302, 1.442695
      %v317 = vpow.pop %v316
      %v318 = vmul.f32 %v303, 1.442695
      %v319 = vpow.pop %v318
      %v320 = vsel %vm271, %v305, 0.0
      %321 = vadd.xlane.f32.xlu0 %v320
      %v322 = vpop.xlane.xlu0 %321
      %v323 = vsel %vm271, %v307, 0.0
      %324 = vadd.xlane.f32.xlu0 %v323
      %v325 = vpop.xlane.xlu0 %324
      %v326 = vsel %vm271, %v309, 0.0
      %327 = vadd.xlane.f32.xlu0 %v326
      %v328 = vpop.xlane.xlu0 %327
      %v329 = vsel %vm271, %v311, 0.0
      %330 = vadd.xlane.f32.xlu0 %v329
      %v331 = vpop.xlane.xlu0 %330
      %v332 = vsel %vm271, %v313, 0.0
      %333 = vadd.xlane.f32.xlu0 %v332
      %v334 = vpop.xlane.xlu0 %333
      %v335 = vsel %vm271, %v315, 0.0
      %336 = vadd.xlane.f32.xlu0 %v335
      %v337 = vpop.xlane.xlu0 %336
      %v338 = vsel %vm271, %v317, 0.0
      %339 = vadd.xlane.f32.xlu0 %v338
      %v340 = vpop.xlane.xlu0 %339
      %v341 = vsel %vm271, %v319, 0.0
      %342 = vadd.xlane.f32.xlu0 %v341
      %v343 = vpop.xlane.xlu0 %342
      %v344 = vrcp.pop %v322
      %v345 = vmul.f32 1.0, %v344
      %v346 = vrcp.pop %v325
      %v347 = vmul.f32 1.0, %v346
      %v348 = vrcp.pop %v328
      %v349 = vmul.f32 1.0, %v348
      %v350 = vrcp.pop %v331
      %v351 = vmul.f32 1.0, %v350
      %v352 = vrcp.pop %v334
      %v353 = vmul.f32 1.0, %v352
      %v354 = vrcp.pop %v337
      %v355 = vmul.f32 1.0, %v354
      %v356 = vrcp.pop %v340
      %v357 = vmul.f32 1.0, %v356
      %v358 = vrcp.pop %v343
      %v359 = vmul.f32 1.0, %v358
      %v360 = vmul.f32 %v305, %v345
      %v361 = vmul.f32 %v307, %v347
      %v362 = vmul.f32 %v309, %v349
      %v363 = vmul.f32 %v311, %v351
      %v364 = vmul.f32 %v313, %v353
      %v365 = vmul.f32 %v315, %v355
      %v366 = vmul.f32 %v317, %v357
      %v367 = vmul.f32 %v319, %v359
      %v368 = vcombine.low %v360, %v362
      %v369 = vcombine.high %v360, %v362
      %v371 = vunpack.c.l.s4 1983009808
      %v372 = vunpack.c.0.s8 %v371
      %v373 = vlaneseq
      %v374 = vshrl.u32 %v373, 7
      %v375 = vsub.s32 %v372, %v374
      %v376 = vrot.slane %v368, %v375
      %v378 = vunpack.c.l.s4 1983009808
      %v379 = vunpack.c.0.s8 %v378
      %v380 = vlaneseq
      %v381 = vshrl.u32 %v380, 7
      %v382 = vsub.s32 %v379, %v381
      %v383 = vrot.slane %v369, %v382
      %v384 = vcombine.low %v361, %v363
      %v385 = vcombine.high %v361, %v363
      %v387 = vunpack.c.l.s4 1983009808
      %v388 = vunpack.c.0.s8 %v387
      %v389 = vlaneseq
      %v390 = vshrl.u32 %v389, 7
      %v391 = vsub.s32 %v388, %v390
      %v392 = vrot.slane %v384, %v391
      %v394 = vunpack.c.l.s4 1983009808
      %v395 = vunpack.c.0.s8 %v394
      %v396 = vlaneseq
      %v397 = vshrl.u32 %v396, 7
      %v398 = vsub.s32 %v395, %v397
      %v399 = vrot.slane %v385, %v398
      %v400 = vcombine.low %v364, %v366
      %v401 = vcombine.high %v364, %v366
      %v403 = vunpack.c.l.s4 1983009808
      %v404 = vunpack.c.0.s8 %v403
      %v405 = vlaneseq
      %v406 = vshrl.u32 %v405, 7
      %v407 = vsub.s32 %v404, %v406
      %v408 = vrot.slane %v400, %v407
      %v410 = vunpack.c.l.s4 1983009808
      %v411 = vunpack.c.0.s8 %v410
      %v412 = vlaneseq
      %v413 = vshrl.u32 %v412, 7
      %v414 = vsub.s32 %v411, %v413
      %v415 = vrot.slane %v401, %v414
      %v416 = vcombine.low %v365, %v367
      %v417 = vcombine.high %v365, %v367
      %v419 = vunpack.c.l.s4 1983009808
      %v420 = vunpack.c.0.s8 %v419
      %v421 = vlaneseq
      %v422 = vshrl.u32 %v421, 7
      %v423 = vsub.s32 %v420, %v422
      %v424 = vrot.slane %v416, %v423
      %v426 = vunpack.c.l.s4 1983009808
      %v427 = vunpack.c.0.s8 %v426
      %v428 = vlaneseq
      %v429 = vshrl.u32 %v428, 7
      %v430 = vsub.s32 %v427, %v429
      %v431 = vrot.slane %v417, %v430
      %v432 = vcombine.low %v376, %v392
      %v433 = vcombine.high %v376, %v392
      %v435 = vunpack.c.l.s4 1934713408
      %v436 = vunpack.c.0.s8 %v435
      %v437 = vlaneseq
      %v438 = vshrl.u32 %v437, 7
      %v439 = vsub.s32 %v436, %v438
      %v440 = vrot.slane %v432, %v439
      %v442 = vunpack.c.l.s4 1934713408
      %v443 = vunpack.c.0.s8 %v442
      %v444 = vlaneseq
      %v445 = vshrl.u32 %v444, 7
      %v446 = vsub.s32 %v443, %v445
      %v447 = vrot.slane %v433, %v446
      %v448 = vcombine.low %v383, %v399
      %v449 = vcombine.high %v383, %v399
      %v451 = vunpack.c.l.s4 1934713408
      %v452 = vunpack.c.0.s8 %v451
      %v453 = vlaneseq
      %v454 = vshrl.u32 %v453, 7
      %v455 = vsub.s32 %v452, %v454
      %v456 = vrot.slane %v448, %v455
      %v458 = vunpack.c.l.s4 1934713408
      %v459 = vunpack.c.0.s8 %v458
      %v460 = vlaneseq
      %v461 = vshrl.u32 %v460, 7
      %v462 = vsub.s32 %v459, %v461
      %v463 = vrot.slane %v449, %v462
      %v464 = vcombine.low %v408, %v424
      %v465 = vcombine.high %v408, %v424
      %v467 = vunpack.c.l.s4 1934713408
      %v468 = vunpack.c.0.s8 %v467
      %v469 = vlaneseq
      %v470 = vshrl.u32 %v469, 7
      %v471 = vsub.s32 %v468, %v470
      %v472 = vrot.slane %v464, %v471
      %v474 = vunpack.c.l.s4 1934713408
      %v475 = vunpack.c.0.s8 %v474
      %v476 = vlaneseq
      %v477 = vshrl.u32 %v476, 7
      %v478 = vsub.s32 %v475, %v477
      %v479 = vrot.slane %v465, %v478
      %v480 = vcombine.low %v415, %v431
      %v481 = vcombine.high %v415, %v431
      %v483 = vunpack.c.l.s4 1934713408
      %v484 = vunpack.c.0.s8 %v483
      %v485 = vlaneseq
      %v486 = vshrl.u32 %v485, 7
      %v487 = vsub.s32 %v484, %v486
      %v488 = vrot.slane %v480, %v487
      %v490 = vunpack.c.l.s4 1934713408
      %v491 = vunpack.c.0.s8 %v490
      %v492 = vlaneseq
      %v493 = vshrl.u32 %v492, 7
      %v494 = vsub.s32 %v491, %v493
      %v495 = vrot.slane %v481, %v494
      %v496 = vcombine.low %v440, %v472
      %v497 = vcombine.high %v440, %v472
      %v498 = vcombine.low %v447, %v479
      %v499 = vcombine.high %v447, %v479
      %v500 = vcombine.low %v456, %v488
      %v501 = vcombine.high %v456, %v488
      %v502 = vcombine.low %v463, %v495
      %v503 = vcombine.high %v463, %v495
      %505 = vrot.lane.b32.xlu0 %v497, 16
      %v506 = vpop.permute.xlu0 %505
      %509 = vrot.lane.b32.xlu0 %v498, 32
      %v510 = vpop.permute.xlu0 %509
      %513 = vrot.lane.b32.xlu0 %v499, 48
      %v514 = vpop.permute.xlu0 %513
      %517 = vrot.lane.b32.xlu0 %v500, 64
      %v518 = vpop.permute.xlu0 %517
      %521 = vrot.lane.b32.xlu0 %v501, 80
      %v522 = vpop.permute.xlu0 %521
      %525 = vrot.lane.b32.xlu0 %v502, 96
      %v526 = vpop.permute.xlu0 %525
      %529 = vrot.lane.b32.xlu0 %v503, 112
      %v530 = vpop.permute.xlu0 %529
      %v532 = vsel %vm271, %v496, %v506
      %vm533 = vcmask 261120
      %v534 = vsel %vm533, %v532, %v510
      %vm535 = vcmask 392192
      %v536 = vsel %vm535, %v534, %v514
      %vm537 = vcmask 523264
      %v538 = vsel %vm537, %v536, %v518
      %vm539 = vcmask 654336
      %v540 = vsel %vm539, %v538, %v522
      %vm541 = vcmask 785408
      %v542 = vsel %vm541, %v540, %v526
      %vm543 = vcmask 916480
      %v544 = vsel %vm543, %v542, %v530
      %545 = vst [vmem:[%s111] sm:$0xff] %v544
      %p546 = scmp.lt.s32.totalorder %s12, 1
      %s547 = scalar_select %p546, %s12, 1
      %s548 = smul.addr %s547, 8
      %s549 = scalar_lea.vmem %s1, %s548
      // Predicated region
      $region25: #{_softmax_rows.1} parent=23 // pred_check
        %p550 = pneg %p56
      $region26: #{_softmax_rows.1} parent=23 // pred_check_branch
        %552 = sbr.rel (%p550) target = $region28
      $region27: #{_softmax_rows.1} parent=23 // pred_region
        _
      $region28: #{_softmax_rows.1} parent=23 // pred_fallthru
        _
    $region24: #{_softmax_rows.1} parent=5 // pred_fallthru
      _
    %p553 = scmp.le.s32.totalorder 2, %s7
    // Predicated region
    $region29: #{_softmax_rows.1} parent=5 // pred_check
      %p554 = pneg %p553
    $region30: #{_softmax_rows.1} parent=5 // pred_check_branch
      %556 = sbr.rel (%p554) target = $region32
    $region31: #{_softmax_rows.1} parent=5 // pred_region
      %s557 = ssub.s32 %s7, 2
      // Predicated region
      $region33: #{_softmax_rows.1} parent=31 // pred_check
        %p558 = pneg %p62
      $region34: #{_softmax_rows.1} parent=31 // pred_check_branch
        %560 = sbr.rel (%p558) target = $region36
      $region35: #{_softmax_rows.1} parent=31 // pred_region
        %p561 = scmp.lt.s32.totalorder %s13, 1
        %s562 = scalar_select %p561, %s13, 1
        %s563 = smul.addr %s562, 8
        %s564 = scalar_lea.vmem %s1, %s563
      $region36: #{_softmax_rows.1} parent=31 // pred_fallthru
        _
    $region32: #{_softmax_rows.1} parent=5 // pred_fallthru
      _
  $region6: #{_softmax_rows.1} parent=0 // loop_footer
    %s11 = sadd.s32 1, %s7
  $region7: #{_softmax_rows.1} parent=0 // loop_footer_branch
    %6 = sbr.rel target = $region3
  $region8: #{_softmax_rows.1} parent=0 // loop_exit
    _

</llo_original>
